<compile_context>
chip_gen: v7x
topology: tpu7x:2x2x1
jax: 0.10.0
libtpu: 0.0.40
codegen_flags: <defaults>
</compile_context>

<pallas_src>
import math

import jax
import jax.numpy as jnp
from jax import lax
from jax.experimental import pallas as pl
from jax.experimental.pallas import tpu as pltpu

# ----- small, module-consistent config --------------------------------------
B, S, H = 2, 16, 32          # batch, seq, hidden_size
NH = 2                       # num_attention_heads
DH = H // NH                 # head dim
I = 64                       # intermediate_size
K = 3                        # cpe_kernel_size
PAD = K // 2                 # Conv1d 'same' padding = kernel_size // 2
EPS = 1e-12                  # BERT LayerNorm eps
BS = B * S

# ----- packed 1-D parameter table layout (rows of a (N_VEC_ROWS, VEC_W) f32) -
ROW_CPE_B = 0
ROW_CPE_W = 1                # K consecutive rows (one per conv tap)
ROW_BQKV = ROW_CPE_W + K     # width 3*H (Q bias pre-scaled by 1/sqrt(DH))
ROW_BO = ROW_BQKV + 1
ROW_G1 = ROW_BO + 1
ROW_B1 = ROW_G1 + 1
ROW_BI = ROW_B1 + 1          # width I
ROW_BOUT = ROW_BI + 1
ROW_G2 = ROW_BOUT + 1
ROW_B2 = ROW_G2 + 1
N_VEC_ROWS = ROW_B2 + 1
VEC_W = ((max(3 * H, I) + 127) // 128) * 128   # lane-padded row width (=128)


def _gelu(x):
    # HF "gelu" (exact, erf-based)
    return 0.5 * x * (1.0 + lax.erf(x * (1.0 / math.sqrt(2.0))))


def _layernorm(x, g, b):
    mu = jnp.mean(x, axis=-1, keepdims=True)
    var = jnp.mean((x - mu) ** 2, axis=-1, keepdims=True)
    return (x - mu) * lax.rsqrt(var + EPS) * g + b


# ----- the kernel: single invocation, whole flattened batch ------------------
def bert_layer_cpe_kernel(x_ref, bias_ref, wqkv_ref, wo_ref, wi_ref, wout_ref,
                          vec_ref, o_ref):
    f32 = jnp.float32
    bf16 = jnp.bfloat16
    x = x_ref[...]                                          # (BS, H) f32

    # --- CPE: depthwise conv1d along seq ('same' pad) + residual -------------
    # taps built with a sublane roll of the VMEM-resident slab; rows that would
    # read across the per-batch sequence boundary are zeroed with an iota mask.
    ri = lax.broadcasted_iota(jnp.int32, (BS, H), 0)
    if S & (S - 1) == 0:
        rmod = jnp.bitwise_and(ri, S - 1)                   # r % S (S power of 2)
    else:
        rmod = ri % S
    conv = jnp.broadcast_to(vec_ref[ROW_CPE_B, :H], (BS, H))
    for t in range(K):                                      # static unroll over taps
        off = t - PAD                                       # tap[r] = x[r + off]
        if off == 0:
            tap = x
        else:
            tap = pltpu.roll(x, shift=(-off) % BS, axis=0)  # XLU sublane rotate
            if off < 0:
                tap = jnp.where(rmod >= -off, tap, 0.0)     # first rows of each batch
            else:
                tap = jnp.where(rmod < S - off, tap, 0.0)   # last rows of each batch
        conv = conv + vec_ref[ROW_CPE_W + t, :H] * tap
    h = x + conv                                            # (BS, H) f32

    # --- fused QKV projection (bf16 operands, f32 accumulate) ----------------
    # 1/sqrt(DH) is pre-folded into the Q columns / Q bias at pack time.
    qkv = jnp.dot(h.astype(bf16), wqkv_ref[...], preferred_element_type=f32)
    qkv = qkv + vec_ref[ROW_BQKV, :3 * H]                   # (BS, 3H)

    # --- self-attention over the packed (B*S) key axis -----------------------
    # bias_ref already merges the key mask with the cross-batch -1e9; after the
    # row-max subtraction masked keys underflow to exactly 0, so this equals
    # independent per-batch softmax.
    bias = bias_ref[...]                                    # (BS, BS) f32
    attn_pre = jnp.broadcast_to(vec_ref[ROW_BO, :H], (BS, H))
    for hd in range(NH):                                    # static unroll over heads
        c0 = hd * DH
        qh = qkv[:, c0:c0 + DH].astype(bf16)
        kh = qkv[:, H + c0:H + c0 + DH].astype(bf16)
        vh = qkv[:, 2 * H + c0:2 * H + c0 + DH].astype(bf16)
        # transposed-RHS contraction: no kh.T materialization
        s = lax.dot_general(qh, kh, (((1,), (1,)), ((), ())),
                            preferred_element_type=f32) + bias
        s = s - jnp.max(s, axis=-1, keepdims=True)
        p = jnp.exp(s)
        p = p * pl.reciprocal(jnp.sum(p, axis=-1, keepdims=True), approx=True)
        ctx_h = jnp.dot(p.astype(bf16), vh, preferred_element_type=f32)
        # fold this head's context straight into the output projection
        attn_pre = attn_pre + jnp.dot(ctx_h.astype(bf16), wo_ref[c0:c0 + DH, :],
                                      preferred_element_type=f32)

    # --- BertSelfOutput: residual + LayerNorm ---------------------------------
    attn = _layernorm(attn_pre + h, vec_ref[ROW_G1, :H], vec_ref[ROW_B1, :H])

    # --- BertIntermediate + BertOutput (feed_forward_chunk) -------------------
    inter = jnp.dot(attn.astype(bf16), wi_ref[...], preferred_element_type=f32)
    inter = _gelu(inter + vec_ref[ROW_BI, :I])
    out = jnp.dot(inter.astype(bf16), wout_ref[...], preferred_element_type=f32)
    out = out + vec_ref[ROW_BOUT, :H]
    y = _layernorm(out + attn, vec_ref[ROW_G2, :H], vec_ref[ROW_B2, :H])

    o_ref[...] = y


# ----- one-time parameter packing (fused+scaled QKV + 1-D vector table) ------
def pack_params(prm):
    bf16 = jnp.bfloat16
    scale = 1.0 / math.sqrt(DH)
    wqkv = jnp.concatenate([prm["wq"] * scale, prm["wk"], prm["wv"]],
                           axis=1).astype(bf16)
    bqkv = jnp.concatenate([prm["bq"] * scale, prm["bk"], prm["bv"]])
    rows = [prm["cpe_b"]] + [prm["cpe_w"][t] for t in range(K)] + [
        bqkv, prm["bo"], prm["g1"], prm["b1"], prm["bi"], prm["bout"],
        prm["g2"], prm["b2"],
    ]
    assert len(rows) == N_VEC_ROWS
    vecs = jnp.stack(
        [jnp.pad(r.astype(jnp.float32), (0, VEC_W - r.shape[0])) for r in rows])
    pad_rows = (-N_VEC_ROWS) % 8
    if pad_rows:
        vecs = jnp.pad(vecs, ((0, pad_rows), (0, 0)))
    return dict(
        wqkv=wqkv,
        wo=prm["wo"].astype(bf16),
        wi=prm["wi"].astype(bf16),
        wout=prm["wout"].astype(bf16),
        vecs=vecs,
    )


# ----- wrapper ----------------------------------------------------------------
def _attn_bias(attn_mask):
    """(BS, BS) additive bias: key mask merged with cross-batch -1e9."""
    mask_flat = attn_mask.reshape(BS).astype(jnp.float32)
    rb = jnp.arange(BS, dtype=jnp.int32)[:, None] // S
    cb = jnp.arange(BS, dtype=jnp.int32)[None, :] // S
    return jnp.where(rb == cb, mask_flat[None, :], jnp.float32(-1e9))


def bert_layer_cpe(x, attn_mask, packed):
    """x: (B,S,H) f32; attn_mask: (B,S) additive f32 (0 keep / -1e9 masked)."""
    x2 = x.reshape(BS, H)                 # wrapper-side reshape: free metadata
    bias = _attn_bias(attn_mask)
    vmem = pl.BlockSpec(memory_space=pltpu.MemorySpace.VMEM)
    # TODO(synk): for a multi-layer encoder, stack per-layer weights along a
    # leading axis and loop over layers inside this one pallas_call to amortize
    # the launch/DMA overhead that dominates at this tiny size.
    y = pl.pallas_call(
        bert_layer_cpe_kernel,
        out_shape=jax.ShapeDtypeStruct((BS, H), jnp.float32),
        in_specs=[vmem] * 7,
        out_specs=vmem,
    )(x2, bias, packed["wqkv"], packed["wo"], packed["wi"], packed["wout"],
      packed["vecs"])
    return y.reshape(B, S, H)


bert_layer_cpe_jit = jax.jit(bert_layer_cpe)


# ----- pure-JAX reference (same math; mirrors the kernel's bf16 MXU operands) -
def reference(x, attn_mask, prm):
    bf16 = jnp.bfloat16

    def mm(a, w):  # bf16-operand matmul with f32 accumulation (as in the kernel)
        return jnp.einsum("...i,io->...o", a.astype(bf16), w.astype(bf16),
                          preferred_element_type=jnp.float32)

    xp = jnp.pad(x, ((0, 0), (PAD, PAD), (0, 0)))
    conv = jnp.zeros_like(x) + prm["cpe_b"]
    for t in range(K):
        conv = conv + prm["cpe_w"][t] * xp[:, t:t + S]
    h = x + conv

    q = mm(h, prm["wq"]) + prm["bq"]
    k = mm(h, prm["wk"]) + prm["bk"]
    v = mm(h, prm["wv"]) + prm["bv"]
    qh = q.reshape(B, S, NH, DH).transpose(0, 2, 1, 3)
    kh = k.reshape(B, S, NH, DH).transpose(0, 2, 1, 3)
    vh = v.reshape(B, S, NH, DH).transpose(0, 2, 1, 3)
    s = jnp.einsum("bhqd,bhkd->bhqk", qh.astype(bf16), kh.astype(bf16),
                   preferred_element_type=jnp.float32) / math.sqrt(DH)
    s = s + attn_mask[:, None, None, :]
    p = jax.nn.softmax(s, axis=-1)
    ctx = jnp.einsum("bhqk,bhkd->bhqd", p.astype(bf16), vh.astype(bf16),
                     preferred_element_type=jnp.float32)
    ctx = ctx.transpose(0, 2, 1, 3).reshape(B, S, H)

    attn = mm(ctx, prm["wo"]) + prm["bo"]
    attn = _layernorm(attn + h, prm["g1"], prm["b1"])
    inter = _gelu(mm(attn, prm["wi"]) + prm["bi"])
    out = mm(inter, prm["wout"]) + prm["bout"]
    return _layernorm(out + attn, prm["g2"], prm["b2"])


# ----- parameter init (deterministic, synthetic) --------------------------------
def make_params(key):
    ks = jax.random.split(key, 16)
    n = lambda k, shape, sc=0.02: (sc * jax.random.normal(k, shape)).astype(jnp.float32)
    prm = dict(
        # depthwise Conv1d(H, H, K, groups=H): weight (H,1,K) -> stored (K,H)
        cpe_w=n(ks[0], (K, H), 0.1),
        cpe_b=n(ks[1], (H,), 0.1),
        # Linear weights are PyTorch (out,in); stored pre-transposed as (in,out)
        wq=n(ks[2], (H, H)), bq=n(ks[3], (H,)),
        wk=n(ks[4], (H, H)), bk=n(ks[5], (H,)),
        wv=n(ks[6], (H, H)), bv=n(ks[7], (H,)),
        wo=n(ks[8], (H, H)), bo=n(ks[9], (H,)),
        g1=jnp.ones((H,), jnp.float32) + n(ks[10], (H,), 0.01),
        b1=n(ks[11], (H,), 0.01),
        wi=n(ks[12], (H, I)), bi=n(ks[13], (I,), 0.01),
        wout=n(ks[14], (I, H)), bout=n(ks[15], (H,), 0.01),
        g2=jnp.ones((H,), jnp.float32),
        b2=jnp.zeros((H,), jnp.float32),
    )
    return prm


if __name__ == "__main__":
    key = jax.random.PRNGKey(0)
    kx, kp = jax.random.split(key)
    x = jax.random.normal(kx, (B, S, H), dtype=jnp.float32)

    # Extended additive attention mask (0 = attend, -1e9 = masked): mask the
    # last 3 key positions of batch element 1. (Note: a fully-masked query row
    # would silently yield a uniform distribution over masked keys.)
    attn_mask = jnp.zeros((B, S), jnp.float32)
    attn_mask = attn_mask.at[1, S - 3:].set(-1e9)

    prm = make_params(kp)
    packed = pack_params(prm)

    out = bert_layer_cpe_jit(x, attn_mask, packed)
    out = jax.block_until_ready(out)

    ref = reference(x, attn_mask, prm)
    assert out.shape == (B, S, H) and out.dtype == jnp.float32
    # Tolerance covers the EUP approximate reciprocal in the kernel's softmax,
    # the pack-time scale folding, and MXU-vs-XLA accumulation-order diffs.
    if not jnp.allclose(out, ref, atol=2e-3, rtol=2e-3):
        raise AssertionError("Pallas kernel output mismatch vs JAX reference")

    print("KERNEL_OK")
</pallas_src>

<mosaic_0001>
module attributes {stable_mosaic.version = 11 : i64} {
  func.func @bert_layer_cpe_kernel(%arg0: memref<32x32xf32, #tpu.memory_space<vmem>>, %arg1: memref<32x32xf32, #tpu.memory_space<vmem>>, %arg2: memref<32x96xbf16, #tpu.memory_space<vmem>>, %arg3: memref<32x32xbf16, #tpu.memory_space<vmem>>, %arg4: memref<32x64xbf16, #tpu.memory_space<vmem>>, %arg5: memref<64x32xbf16, #tpu.memory_space<vmem>>, %arg6: memref<16x128xf32, #tpu.memory_space<vmem>>, %arg7: memref<32x32xf32, #tpu.memory_space<vmem>>) attributes {dimension_semantics = [], scalar_prefetch = 0 : i64, scratch_operands = 0 : i64, tpu.core_type = #tpu.core_type<tc>} {
    %c0 = arith.constant 0 : index
    %c0_0 = arith.constant 0 : index
    %0 = vector.load %arg0[%c0, %c0_0] : memref<32x32xf32, #tpu.memory_space<vmem>>, vector<32x32xf32>
    %1 = tpu.iota {dimensions = array<i32: 0>} : vector<32x32xi32>
    %c15_i32 = arith.constant 15 : i32
    %2 = vector.broadcast %c15_i32 : i32 to vector<32x32xi32>
    %3 = arith.andi %1, %2 : vector<32x32xi32>
    %c0_1 = arith.constant 0 : index
    %c0_2 = arith.constant 0 : index
    %4 = vector.load %arg6[%c0_1, %c0_2] : memref<16x128xf32, #tpu.memory_space<vmem>>, vector<1x32xf32>
    %5 = vector.shape_cast %4 : vector<1x32xf32> to vector<32xf32>
    %6 = vector.shape_cast %5 : vector<32xf32> to vector<1x32xf32>
    %7 = vector.broadcast %6 : vector<1x32xf32> to vector<32x32xf32>
    %c1_i32 = arith.constant 1 : i32
    %8 = tpu.dynamic_rotate %0 by %c1_i32 dim 0 : vector<32x32xf32>, i32 -> vector<32x32xf32>
    %c1_i32_3 = arith.constant 1 : i32
    %9 = vector.broadcast %c1_i32_3 : i32 to vector<32x32xi32>
    %10 = arith.cmpi sge, %3, %9 : vector<32x32xi32>
    %cst = arith.constant 0.000000e+00 : f32
    %11 = vector.broadcast %cst : f32 to vector<32x32xf32>
    %12 = arith.select %10, %8, %11 : vector<32x32xi1>, vector<32x32xf32>
    %c1 = arith.constant 1 : index
    %c0_4 = arith.constant 0 : index
    %13 = vector.load %arg6[%c1, %c0_4] : memref<16x128xf32, #tpu.memory_space<vmem>>, vector<1x32xf32>
    %14 = vector.shape_cast %13 : vector<1x32xf32> to vector<32xf32>
    %15 = vector.shape_cast %14 : vector<32xf32> to vector<1x32xf32>
    %16 = vector.broadcast %15 : vector<1x32xf32> to vector<32x32xf32>
    %17 = arith.mulf %16, %12 : vector<32x32xf32>
    %18 = arith.addf %7, %17 : vector<32x32xf32>
    %c2 = arith.constant 2 : index
    %c0_5 = arith.constant 0 : index
    %19 = vector.load %arg6[%c2, %c0_5] : memref<16x128xf32, #tpu.memory_space<vmem>>, vector<1x32xf32>
    %20 = vector.shape_cast %19 : vector<1x32xf32> to vector<32xf32>
    %21 = vector.shape_cast %20 : vector<32xf32> to vector<1x32xf32>
    %22 = vector.broadcast %21 : vector<1x32xf32> to vector<32x32xf32>
    %23 = arith.mulf %22, %0 : vector<32x32xf32>
    %24 = arith.addf %18, %23 : vector<32x32xf32>
    %c31_i32 = arith.constant 31 : i32
    %25 = tpu.dynamic_rotate %0 by %c31_i32 dim 0 : vector<32x32xf32>, i32 -> vector<32x32xf32>
    %c15_i32_6 = arith.constant 15 : i32
    %26 = vector.broadcast %c15_i32_6 : i32 to vector<32x32xi32>
    %27 = arith.cmpi slt, %3, %26 : vector<32x32xi32>
    %cst_7 = arith.constant 0.000000e+00 : f32
    %28 = vector.broadcast %cst_7 : f32 to vector<32x32xf32>
    %29 = arith.select %27, %25, %28 : vector<32x32xi1>, vector<32x32xf32>
    %c3 = arith.constant 3 : index
    %c0_8 = arith.constant 0 : index
    %30 = vector.load %arg6[%c3, %c0_8] : memref<16x128xf32, #tpu.memory_space<vmem>>, vector<1x32xf32>
    %31 = vector.shape_cast %30 : vector<1x32xf32> to vector<32xf32>
    %32 = vector.shape_cast %31 : vector<32xf32> to vector<1x32xf32>
    %33 = vector.broadcast %32 : vector<1x32xf32> to vector<32x32xf32>
    %34 = arith.mulf %33, %29 : vector<32x32xf32>
    %35 = arith.addf %24, %34 : vector<32x32xf32>
    %36 = arith.addf %0, %35 : vector<32x32xf32>
    %37 = arith.truncf %36 : vector<32x32xf32> to vector<32x32xbf16>
    %c0_9 = arith.constant 0 : index
    %c0_10 = arith.constant 0 : index
    %38 = vector.load %arg2[%c0_9, %c0_10] : memref<32x96xbf16, #tpu.memory_space<vmem>>, vector<32x96xbf16>
    %cst_11 = arith.constant dense<0.000000e+00> : vector<32x96xf32>
    %39 = tpu.matmul %37, %38, %cst_11 {dimension_numbers = #tpu.dot_dimension_numbers<[1], [0], [0], [1], [0, 0, 1, 1], [], []>} : vector<32x32xbf16>, vector<32x96xbf16>, vector<32x96xf32> -> vector<32x96xf32>
    %c4 = arith.constant 4 : index
    %c0_12 = arith.constant 0 : index
    %40 = vector.load %arg6[%c4, %c0_12] : memref<16x128xf32, #tpu.memory_space<vmem>>, vector<1x96xf32>
    %41 = vector.shape_cast %40 : vector<1x96xf32> to vector<96xf32>
    %42 = vector.shape_cast %41 : vector<96xf32> to vector<1x96xf32>
    %43 = vector.broadcast %42 : vector<1x96xf32> to vector<32x96xf32>
    %44 = arith.addf %39, %43 : vector<32x96xf32>
    %c0_13 = arith.constant 0 : index
    %c0_14 = arith.constant 0 : index
    %45 = vector.load %arg1[%c0_13, %c0_14] : memref<32x32xf32, #tpu.memory_space<vmem>>, vector<32x32xf32>
    %c5 = arith.constant 5 : index
    %c0_15 = arith.constant 0 : index
    %46 = vector.load %arg6[%c5, %c0_15] : memref<16x128xf32, #tpu.memory_space<vmem>>, vector<1x32xf32>
    %47 = vector.shape_cast %46 : vector<1x32xf32> to vector<32xf32>
    %48 = vector.shape_cast %47 : vector<32xf32> to vector<1x32xf32>
    %49 = vector.broadcast %48 : vector<1x32xf32> to vector<32x32xf32>
    %50 = vector.extract_strided_slice %44 {offsets = [0, 0], sizes = [32, 16], strides = [1, 1]} : vector<32x96xf32> to vector<32x16xf32>
    %51 = arith.truncf %50 : vector<32x16xf32> to vector<32x16xbf16>
    %52 = vector.extract_strided_slice %44 {offsets = [0, 32], sizes = [32, 16], strides = [1, 1]} : vector<32x96xf32> to vector<32x16xf32>
    %53 = arith.truncf %52 : vector<32x16xf32> to vector<32x16xbf16>
    %54 = vector.extract_strided_slice %44 {offsets = [0, 64], sizes = [32, 16], strides = [1, 1]} : vector<32x96xf32> to vector<32x16xf32>
    %55 = arith.truncf %54 : vector<32x16xf32> to vector<32x16xbf16>
    %cst_16 = arith.constant dense<0.000000e+00> : vector<32x32xf32>
    %56 = tpu.matmul %51, %53, %cst_16 {dimension_numbers = #tpu.dot_dimension_numbers<[1], [1], [0], [0], [0, 0, 1, 0], [], []>} : vector<32x16xbf16>, vector<32x16xbf16>, vector<32x32xf32> -> vector<32x32xf32>
    %57 = arith.addf %56, %45 : vector<32x32xf32>
    %cst_17 = arith.constant dense<0xFF800000> : vector<32xf32>
    %58 = vector.multi_reduction <maximumf>, %57, %cst_17 [1] : vector<32x32xf32> to vector<32xf32>
    %59 = vector.shape_cast %58 : vector<32xf32> to vector<32x1xf32>
    %60 = vector.broadcast %59 : vector<32x1xf32> to vector<32x32xf32>
    %61 = arith.subf %57, %60 : vector<32x32xf32>
    %62 = math.exp %61 : vector<32x32xf32>
    %cst_18 = arith.constant dense<0.000000e+00> : vector<32xf32>
    %63 = vector.multi_reduction <add>, %62, %cst_18 [1] : vector<32x32xf32> to vector<32xf32>
    %64 = vector.shape_cast %63 : vector<32xf32> to vector<32x1xf32>
    %65 = tpu.reciprocal %64 {approx = true} : vector<32x1xf32> -> vector<32x1xf32>
    %66 = vector.broadcast %65 : vector<32x1xf32> to vector<32x32xf32>
    %67 = arith.mulf %62, %66 : vector<32x32xf32>
    %68 = arith.truncf %67 : vector<32x32xf32> to vector<32x32xbf16>
    %cst_19 = arith.constant dense<0.000000e+00> : vector<32x16xf32>
    %69 = tpu.matmul %68, %55, %cst_19 {dimension_numbers = #tpu.dot_dimension_numbers<[1], [0], [0], [1], [0, 0, 1, 1], [], []>} : vector<32x32xbf16>, vector<32x16xbf16>, vector<32x16xf32> -> vector<32x16xf32>
    %70 = arith.truncf %69 : vector<32x16xf32> to vector<32x16xbf16>
    %c0_20 = arith.constant 0 : index
    %c0_21 = arith.constant 0 : index
    %71 = vector.load %arg3[%c0_20, %c0_21] : memref<32x32xbf16, #tpu.memory_space<vmem>>, vector<16x32xbf16>
    %cst_22 = arith.constant dense<0.000000e+00> : vector<32x32xf32>
    %72 = tpu.matmul %70, %71, %cst_22 {dimension_numbers = #tpu.dot_dimension_numbers<[1], [0], [0], [1], [0, 0, 1, 1], [], []>} : vector<32x16xbf16>, vector<16x32xbf16>, vector<32x32xf32> -> vector<32x32xf32>
    %73 = arith.addf %49, %72 : vector<32x32xf32>
    %74 = vector.extract_strided_slice %44 {offsets = [0, 16], sizes = [32, 16], strides = [1, 1]} : vector<32x96xf32> to vector<32x16xf32>
    %75 = arith.truncf %74 : vector<32x16xf32> to vector<32x16xbf16>
    %76 = vector.extract_strided_slice %44 {offsets = [0, 48], sizes = [32, 16], strides = [1, 1]} : vector<32x96xf32> to vector<32x16xf32>
    %77 = arith.truncf %76 : vector<32x16xf32> to vector<32x16xbf16>
    %78 = vector.extract_strided_slice %44 {offsets = [0, 80], sizes = [32, 16], strides = [1, 1]} : vector<32x96xf32> to vector<32x16xf32>
    %79 = arith.truncf %78 : vector<32x16xf32> to vector<32x16xbf16>
    %cst_23 = arith.constant dense<0.000000e+00> : vector<32x32xf32>
    %80 = tpu.matmul %75, %77, %cst_23 {dimension_numbers = #tpu.dot_dimension_numbers<[1], [1], [0], [0], [0, 0, 1, 0], [], []>} : vector<32x16xbf16>, vector<32x16xbf16>, vector<32x32xf32> -> vector<32x32xf32>
    %81 = arith.addf %80, %45 : vector<32x32xf32>
    %cst_24 = arith.constant dense<0xFF800000> : vector<32xf32>
    %82 = vector.multi_reduction <maximumf>, %81, %cst_24 [1] : vector<32x32xf32> to vector<32xf32>
    %83 = vector.shape_cast %82 : vector<32xf32> to vector<32x1xf32>
    %84 = vector.broadcast %83 : vector<32x1xf32> to vector<32x32xf32>
    %85 = arith.subf %81, %84 : vector<32x32xf32>
    %86 = math.exp %85 : vector<32x32xf32>
    %cst_25 = arith.constant dense<0.000000e+00> : vector<32xf32>
    %87 = vector.multi_reduction <add>, %86, %cst_25 [1] : vector<32x32xf32> to vector<32xf32>
    %88 = vector.shape_cast %87 : vector<32xf32> to vector<32x1xf32>
    %89 = tpu.reciprocal %88 {approx = true} : vector<32x1xf32> -> vector<32x1xf32>
    %90 = vector.broadcast %89 : vector<32x1xf32> to vector<32x32xf32>
    %91 = arith.mulf %86, %90 : vector<32x32xf32>
    %92 = arith.truncf %91 : vector<32x32xf32> to vector<32x32xbf16>
    %cst_26 = arith.constant dense<0.000000e+00> : vector<32x16xf32>
    %93 = tpu.matmul %92, %79, %cst_26 {dimension_numbers = #tpu.dot_dimension_numbers<[1], [0], [0], [1], [0, 0, 1, 1], [], []>} : vector<32x32xbf16>, vector<32x16xbf16>, vector<32x16xf32> -> vector<32x16xf32>
    %94 = arith.truncf %93 : vector<32x16xf32> to vector<32x16xbf16>
    %c16 = arith.constant 16 : index
    %c0_27 = arith.constant 0 : index
    %95 = vector.load %arg3[%c16, %c0_27] : memref<32x32xbf16, #tpu.memory_space<vmem>>, vector<16x32xbf16>
    %cst_28 = arith.constant dense<0.000000e+00> : vector<32x32xf32>
    %96 = tpu.matmul %94, %95, %cst_28 {dimension_numbers = #tpu.dot_dimension_numbers<[1], [0], [0], [1], [0, 0, 1, 1], [], []>} : vector<32x16xbf16>, vector<16x32xbf16>, vector<32x32xf32> -> vector<32x32xf32>
    %97 = arith.addf %73, %96 : vector<32x32xf32>
    %98 = arith.addf %97, %36 : vector<32x32xf32>
    %c6 = arith.constant 6 : index
    %c0_29 = arith.constant 0 : index
    %99 = vector.load %arg6[%c6, %c0_29] : memref<16x128xf32, #tpu.memory_space<vmem>>, vector<1x32xf32>
    %100 = vector.shape_cast %99 : vector<1x32xf32> to vector<32xf32>
    %c7 = arith.constant 7 : index
    %c0_30 = arith.constant 0 : index
    %101 = vector.load %arg6[%c7, %c0_30] : memref<16x128xf32, #tpu.memory_space<vmem>>, vector<1x32xf32>
    %102 = vector.shape_cast %101 : vector<1x32xf32> to vector<32xf32>
    %cst_31 = arith.constant dense<0.000000e+00> : vector<32xf32>
    %103 = vector.multi_reduction <add>, %98, %cst_31 [1] : vector<32x32xf32> to vector<32xf32>
    %104 = vector.shape_cast %103 : vector<32xf32> to vector<32x1xf32>
    %cst_32 = arith.constant 3.200000e+01 : f32
    %105 = vector.broadcast %cst_32 : f32 to vector<32x1xf32>
    %106 = arith.divf %104, %105 : vector<32x1xf32>
    %107 = vector.broadcast %106 : vector<32x1xf32> to vector<32x32xf32>
    %108 = arith.subf %98, %107 : vector<32x32xf32>
    %109 = arith.mulf %108, %108 : vector<32x32xf32>
    %cst_33 = arith.constant dense<0.000000e+00> : vector<32xf32>
    %110 = vector.multi_reduction <add>, %109, %cst_33 [1] : vector<32x32xf32> to vector<32xf32>
    %111 = vector.shape_cast %110 : vector<32xf32> to vector<32x1xf32>
    %cst_34 = arith.constant 3.200000e+01 : f32
    %112 = vector.broadcast %cst_34 : f32 to vector<32x1xf32>
    %113 = arith.divf %111, %112 : vector<32x1xf32>
    %114 = vector.broadcast %106 : vector<32x1xf32> to vector<32x32xf32>
    %115 = arith.subf %98, %114 : vector<32x32xf32>
    %cst_35 = arith.constant 9.99999996E-13 : f32
    %116 = vector.broadcast %cst_35 : f32 to vector<32x1xf32>
    %117 = arith.addf %113, %116 : vector<32x1xf32>
    %118 = math.rsqrt %117 : vector<32x1xf32>
    %119 = vector.broadcast %118 : vector<32x1xf32> to vector<32x32xf32>
    %120 = arith.mulf %115, %119 : vector<32x32xf32>
    %121 = vector.shape_cast %100 : vector<32xf32> to vector<1x32xf32>
    %122 = vector.broadcast %121 : vector<1x32xf32> to vector<32x32xf32>
    %123 = arith.mulf %120, %122 : vector<32x32xf32>
    %124 = vector.shape_cast %102 : vector<32xf32> to vector<1x32xf32>
    %125 = vector.broadcast %124 : vector<1x32xf32> to vector<32x32xf32>
    %126 = arith.addf %123, %125 : vector<32x32xf32>
    %127 = arith.truncf %126 : vector<32x32xf32> to vector<32x32xbf16>
    %c0_36 = arith.constant 0 : index
    %c0_37 = arith.constant 0 : index
    %128 = vector.load %arg4[%c0_36, %c0_37] : memref<32x64xbf16, #tpu.memory_space<vmem>>, vector<32x64xbf16>
    %cst_38 = arith.constant dense<0.000000e+00> : vector<32x64xf32>
    %129 = tpu.matmul %127, %128, %cst_38 {dimension_numbers = #tpu.dot_dimension_numbers<[1], [0], [0], [1], [0, 0, 1, 1], [], []>} : vector<32x32xbf16>, vector<32x64xbf16>, vector<32x64xf32> -> vector<32x64xf32>
    %c8 = arith.constant 8 : index
    %c0_39 = arith.constant 0 : index
    %130 = vector.load %arg6[%c8, %c0_39] : memref<16x128xf32, #tpu.memory_space<vmem>>, vector<1x64xf32>
    %131 = vector.shape_cast %130 : vector<1x64xf32> to vector<64xf32>
    %132 = vector.shape_cast %131 : vector<64xf32> to vector<1x64xf32>
    %133 = vector.broadcast %132 : vector<1x64xf32> to vector<32x64xf32>
    %134 = arith.addf %129, %133 : vector<32x64xf32>
    %cst_40 = arith.constant 5.000000e-01 : f32
    %135 = vector.broadcast %cst_40 : f32 to vector<32x64xf32>
    %136 = arith.mulf %135, %134 : vector<32x64xf32>
    %cst_41 = arith.constant 0.707106769 : f32
    %137 = vector.broadcast %cst_41 : f32 to vector<32x64xf32>
    %138 = arith.mulf %134, %137 : vector<32x64xf32>
    %139 = math.erf %138 : vector<32x64xf32>
    %cst_42 = arith.constant 1.000000e+00 : f32
    %140 = vector.broadcast %cst_42 : f32 to vector<32x64xf32>
    %141 = arith.addf %140, %139 : vector<32x64xf32>
    %142 = arith.mulf %136, %141 : vector<32x64xf32>
    %143 = arith.truncf %142 : vector<32x64xf32> to vector<32x64xbf16>
    %c0_43 = arith.constant 0 : index
    %c0_44 = arith.constant 0 : index
    %144 = vector.load %arg5[%c0_43, %c0_44] : memref<64x32xbf16, #tpu.memory_space<vmem>>, vector<64x32xbf16>
    %cst_45 = arith.constant dense<0.000000e+00> : vector<32x32xf32>
    %145 = tpu.matmul %143, %144, %cst_45 {dimension_numbers = #tpu.dot_dimension_numbers<[1], [0], [0], [1], [0, 0, 1, 1], [], []>} : vector<32x64xbf16>, vector<64x32xbf16>, vector<32x32xf32> -> vector<32x32xf32>
    %c9 = arith.constant 9 : index
    %c0_46 = arith.constant 0 : index
    %146 = vector.load %arg6[%c9, %c0_46] : memref<16x128xf32, #tpu.memory_space<vmem>>, vector<1x32xf32>
    %147 = vector.shape_cast %146 : vector<1x32xf32> to vector<32xf32>
    %148 = vector.shape_cast %147 : vector<32xf32> to vector<1x32xf32>
    %149 = vector.broadcast %148 : vector<1x32xf32> to vector<32x32xf32>
    %150 = arith.addf %145, %149 : vector<32x32xf32>
    %151 = arith.addf %150, %126 : vector<32x32xf32>
    %c10 = arith.constant 10 : index
    %c0_47 = arith.constant 0 : index
    %152 = vector.load %arg6[%c10, %c0_47] : memref<16x128xf32, #tpu.memory_space<vmem>>, vector<1x32xf32>
    %153 = vector.shape_cast %152 : vector<1x32xf32> to vector<32xf32>
    %c11 = arith.constant 11 : index
    %c0_48 = arith.constant 0 : index
    %154 = vector.load %arg6[%c11, %c0_48] : memref<16x128xf32, #tpu.memory_space<vmem>>, vector<1x32xf32>
    %155 = vector.shape_cast %154 : vector<1x32xf32> to vector<32xf32>
    %cst_49 = arith.constant dense<0.000000e+00> : vector<32xf32>
    %156 = vector.multi_reduction <add>, %151, %cst_49 [1] : vector<32x32xf32> to vector<32xf32>
    %157 = vector.shape_cast %156 : vector<32xf32> to vector<32x1xf32>
    %cst_50 = arith.constant 3.200000e+01 : f32
    %158 = vector.broadcast %cst_50 : f32 to vector<32x1xf32>
    %159 = arith.divf %157, %158 : vector<32x1xf32>
    %160 = vector.broadcast %159 : vector<32x1xf32> to vector<32x32xf32>
    %161 = arith.subf %151, %160 : vector<32x32xf32>
    %162 = arith.mulf %161, %161 : vector<32x32xf32>
    %cst_51 = arith.constant dense<0.000000e+00> : vector<32xf32>
    %163 = vector.multi_reduction <add>, %162, %cst_51 [1] : vector<32x32xf32> to vector<32xf32>
    %164 = vector.shape_cast %163 : vector<32xf32> to vector<32x1xf32>
    %cst_52 = arith.constant 3.200000e+01 : f32
    %165 = vector.broadcast %cst_52 : f32 to vector<32x1xf32>
    %166 = arith.divf %164, %165 : vector<32x1xf32>
    %167 = vector.broadcast %159 : vector<32x1xf32> to vector<32x32xf32>
    %168 = arith.subf %151, %167 : vector<32x32xf32>
    %cst_53 = arith.constant 9.99999996E-13 : f32
    %169 = vector.broadcast %cst_53 : f32 to vector<32x1xf32>
    %170 = arith.addf %166, %169 : vector<32x1xf32>
    %171 = math.rsqrt %170 : vector<32x1xf32>
    %172 = vector.broadcast %171 : vector<32x1xf32> to vector<32x32xf32>
    %173 = arith.mulf %168, %172 : vector<32x32xf32>
    %174 = vector.shape_cast %153 : vector<32xf32> to vector<1x32xf32>
    %175 = vector.broadcast %174 : vector<1x32xf32> to vector<32x32xf32>
    %176 = arith.mulf %173, %175 : vector<32x32xf32>
    %177 = vector.shape_cast %155 : vector<32xf32> to vector<1x32xf32>
    %178 = vector.broadcast %177 : vector<1x32xf32> to vector<32x32xf32>
    %179 = arith.addf %176, %178 : vector<32x32xf32>
    %c0_54 = arith.constant 0 : index
    %c0_55 = arith.constant 0 : index
    %180 = vector.load %arg7[%c0_54, %c0_55] : memref<32x32xf32, #tpu.memory_space<vmem>>, vector<32x32xf32>
    tpu.vector_store %arg7[%c0_54, %c0_55], %179 {strides = array<i32>} : memref<32x32xf32, #tpu.memory_space<vmem>>, vector<32x32xf32>,
    return
  }
}

</mosaic_0001>

<llo_original>
// kernel: bert_layer_cpe.1
$region0: #{bert_layer_cpe.1}
  #allocation0 [shape = 'u32[]', space=smem, size = 0x4, offset = 0x4, fixed_abs, tag = 'smem constant byte address 0x4 - core index']
  #allocation1 [shape = 'u32[144,128]{1,0:T(1,128)}', space=vmem, size = 0x12000, scoped, tag = 'internal scratch']
  %s0 = inlined_call_operand.vmem [shape: f32[32,32], index: 0, kind: input, shape index: {}]
  %s1 = inlined_call_operand.vmem [shape: f32[32,32], index: 1, kind: input, shape index: {}]
  %s2 = inlined_call_operand.vmem [shape: bf16[32,96], index: 2, kind: input, shape index: {}]
  %s3 = inlined_call_operand.vmem [shape: bf16[32,32], index: 3, kind: input, shape index: {}]
  %s4 = inlined_call_operand.vmem [shape: bf16[32,64], index: 4, kind: input, shape index: {}]
  %s5 = inlined_call_operand.vmem [shape: bf16[64,32], index: 5, kind: input, shape index: {}]
  %s6 = inlined_call_operand.hbm [shape: f32[16,128], index: 6, kind: input, shape index: {}]
  %s7 = inlined_call_operand.hbm [shape: f32[32,32], index: 7, kind: output, shape index: {}]
  %s8 = sld [smem:[#allocation0]]
  $region42: #{bert_layer_cpe.1} parent=0
    _
  %s10 = ssub.s32 1, %s8
  %s11 = scalar_select 0, %s10, %s8
  $region1: #{bert_layer_cpe.1} parent=0
    #allocation2 [shape = 'u8[8192]{0}', space=vmem, size = 0x2000, scoped, tag = 'input window, operand 6, single buffered']
    #allocation3 [shape = 's32[1]{0}', space=sflag, size = 0x4, scoped, tag = 'scoped memory for bert_layer_cpe.1']
    #allocation4 [shape = 's32[1]{0}', space=sflag, size = 0x4, scoped, tag = 'scoped memory for bert_layer_cpe.1']
    #allocation5 [shape = 'u8[16384]{0}', space=vmem, size = 0x4000, scoped, tag = 'output window, operand 0, single buffered']
    %12 = vsyncpa [#allocation3], 0
    %13 = vsyncpa [#allocation4], 0
    // Predicated region
    $region2: #{bert_layer_cpe.1} parent=1 // pred_check
      _
    $region3: #{bert_layer_cpe.1} parent=1 // pred_check_branch
      %15 = sbr.rel (0) target = $region5
    $region4: #{bert_layer_cpe.1} parent=1 // pred_region
      _
    $region5: #{bert_layer_cpe.1} parent=1 // pred_fallthru
      _
    // Predicated region
    $region6: #{bert_layer_cpe.1} parent=1 // pred_check
      _
    $region7: #{bert_layer_cpe.1} parent=1 // pred_check_branch
      %17 = sbr.rel (0) target = $region9
    $region8: #{bert_layer_cpe.1} parent=1 // pred_region
      _
    $region9: #{bert_layer_cpe.1} parent=1 // pred_fallthru
      _
    // Predicated region
    $region10: #{bert_layer_cpe.1} parent=1 // pred_check
      _
    $region11: #{bert_layer_cpe.1} parent=1 // pred_check_branch
      %19 = sbr.rel (0) target = $region13
    $region12: #{bert_layer_cpe.1} parent=1 // pred_region
      _
    $region13: #{bert_layer_cpe.1} parent=1 // pred_fallthru
      _
    // Predicated region
    $region14: #{bert_layer_cpe.1} parent=1 // pred_check
      _
    $region15: #{bert_layer_cpe.1} parent=1 // pred_check_branch
      %21 = sbr.rel (0) target = $region17
    $region16: #{bert_layer_cpe.1} parent=1 // pred_region
      _
    $region17: #{bert_layer_cpe.1} parent=1 // pred_fallthru
      _
    // Predicated region
    $region18: #{bert_layer_cpe.1} parent=1 // pred_check
      _
    $region19: #{bert_layer_cpe.1} parent=1 // pred_check_branch
      %23 = sbr.rel (0) target = $region21
    $region20: #{bert_layer_cpe.1} parent=1 // pred_region
      _
    $region21: #{bert_layer_cpe.1} parent=1 // pred_fallthru
      _
    // Predicated region
    $region22: #{bert_layer_cpe.1} parent=1 // pred_check
      _
    $region23: #{bert_layer_cpe.1} parent=1 // pred_check_branch
      %25 = sbr.rel (0) target = $region25
    $region24: #{bert_layer_cpe.1} parent=1 // pred_region
      _
    $region25: #{bert_layer_cpe.1} parent=1 // pred_fallthru
      _
    // Predicated region
    $region26: #{bert_layer_cpe.1} parent=1 // pred_check
      _
    $region27: #{bert_layer_cpe.1} parent=1 // pred_check_branch
      %27 = sbr.rel (0) target = $region29
    $region28: #{bert_layer_cpe.1} parent=1 // pred_region
      %s29 = ssub.s32 256, 256
      %30 = vsyncadd [#allocation3], %s29
      %s31 = sshll.u32 [#allocation2], 4
      %s32 = int_to_ptr.vmem [resolvable:$true] %s31
      %37 = dma.hbm_to_vmem [thread:$0]  %s6, 256, %s32, [#allocation3], 128, 128, 8
    $region29: #{bert_layer_cpe.1} parent=1 // pred_fallthru
      _
    // Predicated region
    $region30: #{bert_layer_cpe.1} parent=1 // pred_check
      _
    $region31: #{bert_layer_cpe.1} parent=1 // pred_check_branch
      %39 = sbr.rel (0) target = $region33
    $region32: #{bert_layer_cpe.1} parent=1 // pred_region
      %40 = dma.done [#allocation3], 256
    $region33: #{bert_layer_cpe.1} parent=1 // pred_fallthru
      _
    %v42 = vld [vmem:[%s0] sm:$0xff]
    %v43 = vld [vmem:[%s0 + $0x8] sm:$0xff]
    %v44 = vld [vmem:[%s0 + $0x10] sm:$0xff]
    %v45 = vld [vmem:[%s0 + $0x18] sm:$0xff]
    %v46 = vlaneseq
    %v47 = vshrl.u32 %v46, 7
    %v48 = vadd.s32 %v47, 8
    %v49 = vadd.s32 %v47, 16
    %v50 = vadd.s32 %v47, 24
    %v51 = vand.u32 %v47, 15
    %v52 = vand.u32 %v48, 15
    %v53 = vand.u32 %v49, 15
    %v54 = vand.u32 %v50, 15
    %v55 = vld [vmem:[#allocation2] sm:$0x1]
    %v56 = vlaneseq
    %v57 = vshrl.u32 %v56, 7
    %v58 = vsub.s32 0, %v57
    %v59 = vrot.slane %v55, %v58
    %v60 = vrot.slane %v42, 7
    %v61 = vrot.slane %v43, 7
    %v62 = vrot.slane %v44, 7
    %v63 = vrot.slane %v45, 7
    %vm64 = vcmp.lt.s32.totalorder %v47, 1
    %v65 = vsel %vm64, %v62, %v63
    %v66 = vsel %vm64, %v61, %v62
    %v67 = vsel %vm64, %v60, %v61
    %v68 = vsel %vm64, %v63, %v60
    %vm69 = vcmp.ge.s32.totalorder %v51, 1
    %vm70 = vcmp.ge.s32.totalorder %v52, 1
    %vm71 = vcmp.ge.s32.totalorder %v53, 1
    %vm72 = vcmp.ge.s32.totalorder %v54, 1
    %v73 = vsel %vm69, %v68, 0.0
    %v74 = vsel %vm70, %v67, 0.0
    %v75 = vsel %vm71, %v66, 0.0
    %v76 = vsel %vm72, %v65, 0.0
    %v77 = vld [vmem:[#allocation2 + $0x1] sm:$0x1]
    %v78 = vlaneseq
    %v79 = vshrl.u32 %v78, 7
    %v80 = vsub.s32 0, %v79
    %v81 = vrot.slane %v77, %v80
    %v82 = vmul.f32 %v81, %v73
    %v83 = vmul.f32 %v81, %v74
    %v84 = vmul.f32 %v81, %v75
    %v85 = vmul.f32 %v81, %v76
    %v86 = vadd.f32 %v59, %v82
    %v87 = vadd.f32 %v59, %v83
    %v88 = vadd.f32 %v59, %v84
    %v89 = vadd.f32 %v59, %v85
    %v90 = vld [vmem:[#allocation2 + $0x2] sm:$0x1]
    %v91 = vlaneseq
    %v92 = vshrl.u32 %v91, 7
    %v93 = vsub.s32 0, %v92
    %v94 = vrot.slane %v90, %v93
    %v95 = vmul.f32 %v94, %v42
    %v96 = vmul.f32 %v94, %v43
    %v97 = vmul.f32 %v94, %v44
    %v98 = vmul.f32 %v94, %v45
    %v99 = vadd.f32 %v86, %v95
    %v100 = vadd.f32 %v87, %v96
    %v101 = vadd.f32 %v88, %v97
    %v102 = vadd.f32 %v89, %v98
    %v103 = vrot.slane %v42, 1
    %v104 = vrot.slane %v43, 1
    %v105 = vrot.slane %v44, 1
    %v106 = vrot.slane %v45, 1
    %vm107 = vcmp.lt.s32.totalorder %v47, 7
    %v108 = vsel %vm107, %v105, %v106
    %v109 = vsel %vm107, %v104, %v105
    %v110 = vsel %vm107, %v103, %v104
    %v111 = vsel %vm107, %v106, %v103
    %vm112 = vcmp.lt.s32.totalorder %v51, 15
    %vm113 = vcmp.lt.s32.totalorder %v52, 15
    %vm114 = vcmp.lt.s32.totalorder %v53, 15
    %vm115 = vcmp.lt.s32.totalorder %v54, 15
    %v116 = vsel %vm112, %v110, 0.0
    %v117 = vsel %vm113, %v109, 0.0
    %v118 = vsel %vm114, %v108, 0.0
    %v119 = vsel %vm115, %v111, 0.0
    %v120 = vld [vmem:[#allocation2 + $0x3] sm:$0x1]
    %v121 = vlaneseq
    %v122 = vshrl.u32 %v121, 7
    %v123 = vsub.s32 0, %v122
    %v124 = vrot.slane %v120, %v123
    %v125 = vmul.f32 %v124, %v116
    %v126 = vmul.f32 %v124, %v117
    %v127 = vmul.f32 %v124, %v118
    %v128 = vmul.f32 %v124, %v119
    %v129 = vadd.f32 %v99, %v125
    %v130 = vadd.f32 %v100, %v126
    %v131 = vadd.f32 %v101, %v127
    %v132 = vadd.f32 %v102, %v128
    %v133 = vadd.f32 %v42, %v129
    %v134 = vadd.f32 %v43, %v130
    %v135 = vadd.f32 %v44, %v131
    %v136 = vadd.f32 %v45, %v132
    %v137 = vpack.c.bf16 %v134, %v133
    %v138 = vpack.c.bf16 %v136, %v135
    %v139 = vld [vmem:[%s2] sm:$0xf]
    %v140 = vld [vmem:[%s2 + $0x4] sm:$0xf]
    %v141 = vld [vmem:[%s2 + $0x8] sm:$0xf]
    %v142 = vld [vmem:[%s2 + $0xc] sm:$0xf]
    %v143 = vld [vmem:[#allocation2 + $0x4] sm:$0x1]
    %v144 = vlaneseq
    %v145 = vshrl.u32 %v144, 7
    %v146 = vsub.s32 0, %v145
    %v147 = vrot.slane %v143, %v146
    %v152 = vunpack.c.l.b16 %v139
    %v153 = vunpack.c.l.b16 %v140
    %v154 = vunpack.c.l.b16 %v141
    %v155 = vunpack.c.l.b16 %v142
    %v156 = vpack.c.b16 %v153, %v152
    %v157 = vpack.c.b16 %v155, %v154
    %vm160 = vcmask 261120
    %v162 = vsel %vm160, %v137, 0
    %v165 = vsel %vm160, %v138, 0
    %167 = vmatprep.subr.bf16.mxu0 0
    %168 = vmatpush1.bf16.msra.mxu0 %v156
    %169 = vmatprep.subr.bf16.mxu0 0
    %170 = vmatpush1.bf16.msra.mxu0 %v157
    %171 = vmatprep.subr.bf16.mxu0 0
    %172 = vmatpush1.bf16.msra.mxu0 0
    %173 = vmatprep.subr.bf16.mxu0 0
    %174 = vmatpush1.bf16.msra.mxu0 0
    %175 = vmatprep.subr.bf16.mxu0 0
    %176 = vmatpush1.bf16.msra.mxu0 0
    %177 = vmatprep.subr.bf16.mxu0 0
    %178 = vmatpush1.bf16.msra.mxu0 0
    %179 = vmatprep.subr.bf16.mxu0 0
    %180 = vmatpush1.bf16.msra.mxu0 0
    %181 = vmatprep.subr.bf16.mxu0 0
    %182 = vmatpush1.bf16.msra.mxu0 0
    %183 = vmatprep.subr.bf16.mxu0 0
    %184 = vmatpush1.bf16.msra.mxu0 0
    %185 = vmatprep.subr.bf16.mxu0 0
    %186 = vmatpush1.bf16.msra.mxu0 0
    %187 = vmatprep.subr.bf16.mxu0 0
    %188 = vmatpush1.bf16.msra.mxu0 0
    %189 = vmatprep.subr.bf16.mxu0 0
    %190 = vmatpush1.bf16.msra.mxu0 0
    %191 = vmatprep.subr.bf16.mxu0 0
    %192 = vmatpush1.bf16.msra.mxu0 0
    %193 = vmatprep.subr.bf16.mxu0 0
    %194 = vmatpush1.bf16.msra.mxu0 0
    %195 = vmatprep.subr.bf16.mxu0 0
    %196 = vmatpush1.bf16.msra.mxu0 0
    %197 = vmatprep.subr.bf16.mxu0 0
    %198 = vmatpush1.bf16.msra.mxu0 0
    %199 = vmatprep.mubr.bf16.mxu0 0
    %200 = vmatmul.mubr.bf16.gmra.mrb[0].mxu0 %v162
    %v201 = vpop.f32.mrb[0].mxu0
    %v202 = vadd.f32 %v147, %v201
    %v203 = vpop.f32.mrb[0].mxu0
    %v204 = vpop.f32.mrb[0].mxu0
    %v205 = vadd.f32 %v147, %v204
    %v206 = vpop.f32.mrb[0].mxu0
    %207 = vmatprep.mubr.bf16.mxu0 0
    %208 = vmatmul.mubr.bf16.gmra.mrb[0].mxu0 %v165
    %v209 = vpop.f32.mrb[0].mxu0
    %v210 = vadd.f32 %v147, %v209
    %v211 = vpop.f32.mrb[0].mxu0
    %v212 = vpop.f32.mrb[0].mxu0
    %v213 = vadd.f32 %v147, %v212
    %v214 = vpop.f32.mrb[0].mxu0
    %215 = vdwg.mxu0
    %v216 = vld [vmem:[%s1] sm:$0xff]
    %v217 = vld [vmem:[%s1 + $0x8] sm:$0xff]
    %v218 = vld [vmem:[%s1 + $0x10] sm:$0xff]
    %v219 = vld [vmem:[%s1 + $0x18] sm:$0xff]
    %v220 = vld [vmem:[#allocation2 + $0x5] sm:$0x1]
    %v221 = vlaneseq
    %v222 = vshrl.u32 %v221, 7
    %v223 = vsub.s32 0, %v222
    %v224 = vrot.slane %v220, %v223
    %v225 = vpack.c.bf16 %v205, %v202
    %v226 = vpack.c.bf16 %v213, %v210
    %229 = vrot.lane.b32.xlu0 %v225, 96
    %v230 = vpop.permute.xlu0 %229
    %231 = vrot.lane.b32.xlu0 %v226, 96
    %v232 = vpop.permute.xlu0 %231
    %vm233 = vcmask 130048
    %v235 = vsel %vm233, %v225, 0
    %v238 = vsel %vm233, %v226, 0
    %v241 = vsel %vm233, %v230, 0
    %v244 = vsel %vm233, %v232, 0
    %246 = vmatprep.subr.bf16.mxu0 0
    %247 = vmatpush1.bf16.xpose.msra.mxu0 %v241
    %248 = vmatprep.subr.bf16.mxu0 0
    %249 = vmatpush1.bf16.xpose.msra.mxu0 %v244
    %250 = vmatprep.subr.bf16.mxu0 0
    %251 = vmatpush1.bf16.xpose.msra.mxu0 0
    %252 = vmatprep.subr.bf16.mxu0 0
    %253 = vmatpush1.bf16.xpose.msra.mxu0 0
    %254 = vmatprep.subr.bf16.mxu0 0
    %255 = vmatpush1.bf16.xpose.msra.mxu0 0
    %256 = vmatprep.subr.bf16.mxu0 0
    %257 = vmatpush1.bf16.xpose.msra.mxu0 0
    %258 = vmatprep.subr.bf16.mxu0 0
    %259 = vmatpush1.bf16.xpose.msra.mxu0 0
    %260 = vmatprep.subr.bf16.mxu0 0
    %261 = vmatpush1.bf16.xpose.msra.mxu0 0
    %262 = vmatprep.subr.bf16.mxu0 0
    %263 = vmatpush1.bf16.xpose.msra.mxu0 0
    %264 = vmatprep.subr.bf16.mxu0 0
    %265 = vmatpush1.bf16.xpose.msra.mxu0 0
    %266 = vmatprep.subr.bf16.mxu0 0
    %267 = vmatpush1.bf16.xpose.msra.mxu0 0
    %268 = vmatprep.subr.bf16.mxu0 0
    %269 = vmatpush1.bf16.xpose.msra.mxu0 0
    %270 = vmatprep.subr.bf16.mxu0 0
    %271 = vmatpush1.bf16.xpose.msra.mxu0 0
    %272 = vmatprep.subr.bf16.mxu0 0
    %273 = vmatpush1.bf16.xpose.msra.mxu0 0
    %274 = vmatprep.subr.bf16.mxu0 0
    %275 = vmatpush1.bf16.xpose.msra.mxu0 0
    %276 = vmatprep.subr.bf16.mxu0 0
    %277 = vmatpush1.bf16.xpose.msra.mxu0 0
    %278 = vmatprep.mubr.bf16.mxu0 0
    %279 = vmatmul.mubr.bf16.gmra.mrb[0].mxu0 %v235
    %v280 = vpop.f32.mrb[0].mxu0
    %v281 = vadd.f32 %v216, %v280
    %v282 = vpop.f32.mrb[0].mxu0
    %v283 = vpop.f32.mrb[0].mxu0
    %v284 = vadd.f32 %v217, %v283
    %v285 = vpop.f32.mrb[0].mxu0
    %286 = vmatprep.mubr.bf16.mxu0 0
    %287 = vmatmul.mubr.bf16.gmra.mrb[0].mxu0 %v238
    %v288 = vpop.f32.mrb[0].mxu0
    %v289 = vadd.f32 %v218, %v288
    %v290 = vpop.f32.mrb[0].mxu0
    %v291 = vpop.f32.mrb[0].mxu0
    %v292 = vadd.f32 %v219, %v291
    %v293 = vpop.f32.mrb[0].mxu0
    %294 = vdwg.mxu0
    %v295 = vsel %vm160, %v281, -inf
    %296 = vmax.xlane.f32.xlu0 %v295
    %v297 = vpop.xlane.xlu0 %296
    %v298 = vsel %vm160, %v284, -inf
    %299 = vmax.xlane.f32.xlu0 %v298
    %v300 = vpop.xlane.xlu0 %299
    %v301 = vsel %vm160, %v289, -inf
    %302 = vmax.xlane.f32.xlu0 %v301
    %v303 = vpop.xlane.xlu0 %302
    %v304 = vsel %vm160, %v292, -inf
    %305 = vmax.xlane.f32.xlu0 %v304
    %v306 = vpop.xlane.xlu0 %305
    %v307 = vsub.f32 %v281, %v297
    %v308 = vsub.f32 %v284, %v300
    %v309 = vsub.f32 %v289, %v303
    %v310 = vsub.f32 %v292, %v306
    %v311 = vmul.f32 %v307, 1.442695
    %v312 = vpow.pop %v311
    %v313 = vmul.f32 %v308, 1.442695
    %v314 = vpow.pop %v313
    %v315 = vmul.f32 %v309, 1.442695
    %v316 = vpow.pop %v315
    %v317 = vmul.f32 %v310, 1.442695
    %v318 = vpow.pop %v317
    %v319 = vsel %vm160, %v312, 0.0
    %320 = vadd.xlane.f32.xlu0 %v319
    %v321 = vpop.xlane.xlu0 %320
    %v322 = vsel %vm160, %v314, 0.0
    %323 = vadd.xlane.f32.xlu0 %v322
    %v324 = vpop.xlane.xlu0 %323
    %v325 = vsel %vm160, %v316, 0.0
    %326 = vadd.xlane.f32.xlu0 %v325
    %v327 = vpop.xlane.xlu0 %326
    %v328 = vsel %vm160, %v318, 0.0
    %329 = vadd.xlane.f32.xlu0 %v328
    %v330 = vpop.xlane.xlu0 %329
    %v331 = vrcp.pop %v321
    %v332 = vrcp.pop %v324
    %v333 = vrcp.pop %v327
    %v334 = vrcp.pop %v330
    %v335 = vmul.f32 %v312, %v331
    %v336 = vmul.f32 %v314, %v332
    %v337 = vmul.f32 %v316, %v333
    %v338 = vmul.f32 %v318, %v334
    %v339 = vpack.c.bf16 %v336, %v335
    %v340 = vpack.c.bf16 %v338, %v337
    %341 = vrot.lane.b32.xlu0 %v225, 64
    %v342 = vpop.permute.xlu0 %341
    %343 = vrot.lane.b32.xlu0 %v226, 64
    %v344 = vpop.permute.xlu0 %343
    %v348 = vsel %vm160, %v339, 0
    %v351 = vsel %vm160, %v340, 0
    %353 = vmatprep.subr.bf16.mxu0 0
    %354 = vmatpush1.bf16.msra.mxu0 %v342
    %355 = vmatprep.subr.bf16.mxu0 0
    %356 = vmatpush1.bf16.msra.mxu0 %v344
    %357 = vmatprep.subr.bf16.mxu0 0
    %358 = vmatpush1.bf16.msra.mxu0 0
    %359 = vmatprep.subr.bf16.mxu0 0
    %360 = vmatpush1.bf16.msra.mxu0 0
    %361 = vmatprep.subr.bf16.mxu0 0
    %362 = vmatpush1.bf16.msra.mxu0 0
    %363 = vmatprep.subr.bf16.mxu0 0
    %364 = vmatpush1.bf16.msra.mxu0 0
    %365 = vmatprep.subr.bf16.mxu0 0
    %366 = vmatpush1.bf16.msra.mxu0 0
    %367 = vmatprep.subr.bf16.mxu0 0
    %368 = vmatpush1.bf16.msra.mxu0 0
    %369 = vmatprep.subr.bf16.mxu0 0
    %370 = vmatpush1.bf16.msra.mxu0 0
    %371 = vmatprep.subr.bf16.mxu0 0
    %372 = vmatpush1.bf16.msra.mxu0 0
    %373 = vmatprep.subr.bf16.mxu0 0
    %374 = vmatpush1.bf16.msra.mxu0 0
    %375 = vmatprep.subr.bf16.mxu0 0
    %376 = vmatpush1.bf16.msra.mxu0 0
    %377 = vmatprep.subr.bf16.mxu0 0
    %378 = vmatpush1.bf16.msra.mxu0 0
    %379 = vmatprep.subr.bf16.mxu0 0
    %380 = vmatpush1.bf16.msra.mxu0 0
    %381 = vmatprep.subr.bf16.mxu0 0
    %382 = vmatpush1.bf16.msra.mxu0 0
    %383 = vmatprep.subr.bf16.mxu0 0
    %384 = vmatpush1.bf16.msra.mxu0 0
    %385 = vmatprep.mubr.bf16.mxu0 0
    %386 = vmatmul.mubr.bf16.gmra.mrb[0].mxu0 %v348
    %v387 = vpop.f32.mrb[0].mxu0
    %v388 = vadd.f32 0.0, %v387
    %v389 = vpop.f32.mrb[0].mxu0
    %v390 = vpop.f32.mrb[0].mxu0
    %v391 = vadd.f32 0.0, %v390
    %v392 = vpop.f32.mrb[0].mxu0
    %393 = vmatprep.mubr.bf16.mxu0 0
    %394 = vmatmul.mubr.bf16.gmra.mrb[0].mxu0 %v351
    %v395 = vpop.f32.mrb[0].mxu0
    %v396 = vadd.f32 0.0, %v395
    %v397 = vpop.f32.mrb[0].mxu0
    %v398 = vpop.f32.mrb[0].mxu0
    %v399 = vadd.f32 0.0, %v398
    %v400 = vpop.f32.mrb[0].mxu0
    %401 = vdwg.mxu0
    %v402 = vpack.c.bf16 %v391, %v388
    %v403 = vpack.c.bf16 %v399, %v396
    %v404 = vld [vmem:[%s3] sm:$0xf]
    %v405 = vld [vmem:[%s3 + $0x4] sm:$0xf]
    %v408 = vunpack.c.l.b16 %v404
    %v409 = vunpack.c.l.b16 %v405
    %v410 = vpack.c.b16 %v409, %v408
    %v413 = vsel %vm233, %v402, 0
    %v416 = vsel %vm233, %v403, 0
    %418 = vmatprep.subr.bf16.mxu0 0
    %419 = vmatpush1.bf16.msra.mxu0 %v410
    %420 = vmatprep.subr.bf16.mxu0 0
    %421 = vmatpush1.bf16.msra.mxu0 0
    %422 = vmatprep.subr.bf16.mxu0 0
    %423 = vmatpush1.bf16.msra.mxu0 0
    %424 = vmatprep.subr.bf16.mxu0 0
    %425 = vmatpush1.bf16.msra.mxu0 0
    %426 = vmatprep.subr.bf16.mxu0 0
    %427 = vmatpush1.bf16.msra.mxu0 0
    %428 = vmatprep.subr.bf16.mxu0 0
    %429 = vmatpush1.bf16.msra.mxu0 0
    %430 = vmatprep.subr.bf16.mxu0 0
    %431 = vmatpush1.bf16.msra.mxu0 0
    %432 = vmatprep.subr.bf16.mxu0 0
    %433 = vmatpush1.bf16.msra.mxu0 0
    %434 = vmatprep.subr.bf16.mxu0 0
    %435 = vmatpush1.bf16.msra.mxu0 0
    %436 = vmatprep.subr.bf16.mxu0 0
    %437 = vmatpush1.bf16.msra.mxu0 0
    %438 = vmatprep.subr.bf16.mxu0 0
    %439 = vmatpush1.bf16.msra.mxu0 0
    %440 = vmatprep.subr.bf16.mxu0 0
    %441 = vmatpush1.bf16.msra.mxu0 0
    %442 = vmatprep.subr.bf16.mxu0 0
    %443 = vmatpush1.bf16.msra.mxu0 0
    %444 = vmatprep.subr.bf16.mxu0 0
    %445 = vmatpush1.bf16.msra.mxu0 0
    %446 = vmatprep.subr.bf16.mxu0 0
    %447 = vmatpush1.bf16.msra.mxu0 0
    %448 = vmatprep.subr.bf16.mxu0 0
    %449 = vmatpush1.bf16.msra.mxu0 0
    %450 = vmatprep.mubr.bf16.mxu0 0
    %451 = vmatmul.mubr.bf16.gmra.mrb[0].mxu0 %v413
    %v452 = vpop.f32.mrb[0].mxu0
    %v453 = vadd.f32 0.0, %v452
    %v454 = vpop.f32.mrb[0].mxu0
    %v455 = vpop.f32.mrb[0].mxu0
    %v456 = vadd.f32 0.0, %v455
    %v457 = vpop.f32.mrb[0].mxu0
    %458 = vmatprep.mubr.bf16.mxu0 0
    %459 = vmatmul.mubr.bf16.gmra.mrb[0].mxu0 %v416
    %v460 = vpop.f32.mrb[0].mxu0
    %v461 = vadd.f32 0.0, %v460
    %v462 = vpop.f32.mrb[0].mxu0
    %v463 = vpop.f32.mrb[0].mxu0
    %v464 = vadd.f32 0.0, %v463
    %v465 = vpop.f32.mrb[0].mxu0
    %466 = vdwg.mxu0
    %v467 = vadd.f32 %v224, %v453
    %v468 = vadd.f32 %v224, %v456
    %v469 = vadd.f32 %v224, %v461
    %v470 = vadd.f32 %v224, %v464
    %471 = vrot.lane.b32.xlu0 %v225, 112
    %v472 = vpop.permute.xlu0 %471
    %473 = vrot.lane.b32.xlu0 %v226, 112
    %v474 = vpop.permute.xlu0 %473
    %475 = vrot.lane.b32.xlu0 %v225, 80
    %v476 = vpop.permute.xlu0 %475
    %477 = vrot.lane.b32.xlu0 %v226, 80
    %v478 = vpop.permute.xlu0 %477
    %v480 = vsel %vm233, %v472, 0
    %v483 = vsel %vm233, %v474, 0
    %v486 = vsel %vm233, %v476, 0
    %v489 = vsel %vm233, %v478, 0
    %491 = vmatprep.subr.bf16.mxu0 0
    %492 = vmatpush1.bf16.xpose.msra.mxu0 %v486
    %493 = vmatprep.subr.bf16.mxu0 0
    %494 = vmatpush1.bf16.xpose.msra.mxu0 %v489
    %495 = vmatprep.subr.bf16.mxu0 0
    %496 = vmatpush1.bf16.xpose.msra.mxu0 0
    %497 = vmatprep.subr.bf16.mxu0 0
    %498 = vmatpush1.bf16.xpose.msra.mxu0 0
    %499 = vmatprep.subr.bf16.mxu0 0
    %500 = vmatpush1.bf16.xpose.msra.mxu0 0
    %501 = vmatprep.subr.bf16.mxu0 0
    %502 = vmatpush1.bf16.xpose.msra.mxu0 0
    %503 = vmatprep.subr.bf16.mxu0 0
    %504 = vmatpush1.bf16.xpose.msra.mxu0 0
    %505 = vmatprep.subr.bf16.mxu0 0
    %506 = vmatpush1.bf16.xpose.msra.mxu0 0
    %507 = vmatprep.subr.bf16.mxu0 0
    %508 = vmatpush1.bf16.xpose.msra.mxu0 0
    %509 = vmatprep.subr.bf16.mxu0 0
    %510 = vmatpush1.bf16.xpose.msra.mxu0 0
    %511 = vmatprep.subr.bf16.mxu0 0
    %512 = vmatpush1.bf16.xpose.msra.mxu0 0
    %513 = vmatprep.subr.bf16.mxu0 0
    %514 = vmatpush1.bf16.xpose.msra.mxu0 0
    %515 = vmatprep.subr.bf16.mxu0 0
    %516 = vmatpush1.bf16.xpose.msra.mxu0 0
    %517 = vmatprep.subr.bf16.mxu0 0
    %518 = vmatpush1.bf16.xpose.msra.mxu0 0
    %519 = vmatprep.subr.bf16.mxu0 0
    %520 = vmatpush1.bf16.xpose.msra.mxu0 0
    %521 = vmatprep.subr.bf16.mxu0 0
    %522 = vmatpush1.bf16.xpose.msra.mxu0 0
    %523 = vmatprep.mubr.bf16.mxu0 0
    %524 = vmatmul.mubr.bf16.gmra.mrb[0].mxu0 %v480
    %v525 = vpop.f32.mrb[0].mxu0
    %v526 = vadd.f32 %v216, %v525
    %v527 = vpop.f32.mrb[0].mxu0
    %v528 = vpop.f32.mrb[0].mxu0
    %v529 = vadd.f32 %v217, %v528
    %v530 = vpop.f32.mrb[0].mxu0
    %531 = vmatprep.mubr.bf16.mxu0 0
    %532 = vmatmul.mubr.bf16.gmra.mrb[0].mxu0 %v483
    %v533 = vpop.f32.mrb[0].mxu0
    %v534 = vadd.f32 %v218, %v533
    %v535 = vpop.f32.mrb[0].mxu0
    %v536 = vpop.f32.mrb[0].mxu0
    %v537 = vadd.f32 %v219, %v536
    %v538 = vpop.f32.mrb[0].mxu0
    %539 = vdwg.mxu0
    %v540 = vsel %vm160, %v526, -inf
    %541 = vmax.xlane.f32.xlu0 %v540
    %v542 = vpop.xlane.xlu0 %541
    %v543 = vsel %vm160, %v529, -inf
    %544 = vmax.xlane.f32.xlu0 %v543
    %v545 = vpop.xlane.xlu0 %544
    %v546 = vsel %vm160, %v534, -inf
    %547 = vmax.xlane.f32.xlu0 %v546
    %v548 = vpop.xlane.xlu0 %547
    %v549 = vsel %vm160, %v537, -inf
    %550 = vmax.xlane.f32.xlu0 %v549
    %v551 = vpop.xlane.xlu0 %550
    %v552 = vsub.f32 %v526, %v542
    %v553 = vsub.f32 %v529, %v545
    %v554 = vsub.f32 %v534, %v548
    %v555 = vsub.f32 %v537, %v551
    %v556 = vmul.f32 %v552, 1.442695
    %v557 = vpow.pop %v556
    %v558 = vmul.f32 %v553, 1.442695
    %v559 = vpow.pop %v558
    %v560 = vmul.f32 %v554, 1.442695
    %v561 = vpow.pop %v560
    %v562 = vmul.f32 %v555, 1.442695
    %v563 = vpow.pop %v562
    %v564 = vsel %vm160, %v557, 0.0
    %565 = vadd.xlane.f32.xlu0 %v564
    %v566 = vpop.xlane.xlu0 %565
    %v567 = vsel %vm160, %v559, 0.0
    %568 = vadd.xlane.f32.xlu0 %v567
    %v569 = vpop.xlane.xlu0 %568
    %v570 = vsel %vm160, %v561, 0.0
    %571 = vadd.xlane.f32.xlu0 %v570
    %v572 = vpop.xlane.xlu0 %571
    %v573 = vsel %vm160, %v563, 0.0
    %574 = vadd.xlane.f32.xlu0 %v573
    %v575 = vpop.xlane.xlu0 %574
    %v576 = vrcp.pop %v566
    %v577 = vrcp.pop %v569
    %v578 = vrcp.pop %v572
    %v579 = vrcp.pop %v575
    %v580 = vmul.f32 %v557, %v576
    %v581 = vmul.f32 %v559, %v577
    %v582 = vmul.f32 %v561, %v578
    %v583 = vmul.f32 %v563, %v579
    %v584 = vpack.c.bf16 %v581, %v580
    %v585 = vpack.c.bf16 %v583, %v582
    %586 = vrot.lane.b32.xlu0 %v225, 48
    %v587 = vpop.permute.xlu0 %586
    %588 = vrot.lane.b32.xlu0 %v226, 48
    %v589 = vpop.permute.xlu0 %588
    %v593 = vsel %vm160, %v584, 0
    %v596 = vsel %vm160, %v585, 0
    %598 = vmatprep.subr.bf16.mxu0 0
    %599 = vmatpush1.bf16.msra.mxu0 %v587
    %600 = vmatprep.subr.bf16.mxu0 0
    %601 = vmatpush1.bf16.msra.mxu0 %v589
    %602 = vmatprep.subr.bf16.mxu0 0
    %603 = vmatpush1.bf16.msra.mxu0 0
    %604 = vmatprep.subr.bf16.mxu0 0
    %605 = vmatpush1.bf16.msra.mxu0 0
    %606 = vmatprep.subr.bf16.mxu0 0
    %607 = vmatpush1.bf16.msra.mxu0 0
    %608 = vmatprep.subr.bf16.mxu0 0
    %609 = vmatpush1.bf16.msra.mxu0 0
    %610 = vmatprep.subr.bf16.mxu0 0
    %611 = vmatpush1.bf16.msra.mxu0 0
    %612 = vmatprep.subr.bf16.mxu0 0
    %613 = vmatpush1.bf16.msra.mxu0 0
    %614 = vmatprep.subr.bf16.mxu0 0
    %615 = vmatpush1.bf16.msra.mxu0 0
    %616 = vmatprep.subr.bf16.mxu0 0
    %617 = vmatpush1.bf16.msra.mxu0 0
    %618 = vmatprep.subr.bf16.mxu0 0
    %619 = vmatpush1.bf16.msra.mxu0 0
    %620 = vmatprep.subr.bf16.mxu0 0
    %621 = vmatpush1.bf16.msra.mxu0 0
    %622 = vmatprep.subr.bf16.mxu0 0
    %623 = vmatpush1.bf16.msra.mxu0 0
    %624 = vmatprep.subr.bf16.mxu0 0
    %625 = vmatpush1.bf16.msra.mxu0 0
    %626 = vmatprep.subr.bf16.mxu0 0
    %627 = vmatpush1.bf16.msra.mxu0 0
    %628 = vmatprep.subr.bf16.mxu0 0
    %629 = vmatpush1.bf16.msra.mxu0 0
    %630 = vmatprep.mubr.bf16.mxu0 0
    %631 = vmatmul.mubr.bf16.gmra.mrb[0].mxu0 %v593
    %v632 = vpop.f32.mrb[0].mxu0
    %v633 = vadd.f32 0.0, %v632
    %v634 = vpop.f32.mrb[0].mxu0
    %v635 = vpop.f32.mrb[0].mxu0
    %v636 = vadd.f32 0.0, %v635
    %v637 = vpop.f32.mrb[0].mxu0
    %638 = vmatprep.mubr.bf16.mxu0 0
    %639 = vmatmul.mubr.bf16.gmra.mrb[0].mxu0 %v596
    %v640 = vpop.f32.mrb[0].mxu0
    %v641 = vadd.f32 0.0, %v640
    %v642 = vpop.f32.mrb[0].mxu0
    %v643 = vpop.f32.mrb[0].mxu0
    %v644 = vadd.f32 0.0, %v643
    %v645 = vpop.f32.mrb[0].mxu0
    %646 = vdwg.mxu0
    %v647 = vpack.c.bf16 %v636, %v633
    %v648 = vpack.c.bf16 %v644, %v641
    %v649 = vld [vmem:[%s3 + $0x8] sm:$0xf]
    %v650 = vld [vmem:[%s3 + $0xc] sm:$0xf]
    %v653 = vunpack.c.l.b16 %v649
    %v654 = vunpack.c.l.b16 %v650
    %v655 = vpack.c.b16 %v654, %v653
    %v658 = vsel %vm233, %v647, 0
    %v661 = vsel %vm233, %v648, 0
    %663 = vmatprep.subr.bf16.mxu0 0
    %664 = vmatpush1.bf16.msra.mxu0 %v655
    %665 = vmatprep.subr.bf16.mxu0 0
    %666 = vmatpush1.bf16.msra.mxu0 0
    %667 = vmatprep.subr.bf16.mxu0 0
    %668 = vmatpush1.bf16.msra.mxu0 0
    %669 = vmatprep.subr.bf16.mxu0 0
    %670 = vmatpush1.bf16.msra.mxu0 0
    %671 = vmatprep.subr.bf16.mxu0 0
    %672 = vmatpush1.bf16.msra.mxu0 0
    %673 = vmatprep.subr.bf16.mxu0 0
    %674 = vmatpush1.bf16.msra.mxu0 0
    %675 = vmatprep.subr.bf16.mxu0 0
    %676 = vmatpush1.bf16.msra.mxu0 0
    %677 = vmatprep.subr.bf16.mxu0 0
    %678 = vmatpush1.bf16.msra.mxu0 0
    %679 = vmatprep.subr.bf16.mxu0 0
    %680 = vmatpush1.bf16.msra.mxu0 0
    %681 = vmatprep.subr.bf16.mxu0 0
    %682 = vmatpush1.bf16.msra.mxu0 0
    %683 = vmatprep.subr.bf16.mxu0 0
    %684 = vmatpush1.bf16.msra.mxu0 0
    %685 = vmatprep.subr.bf16.mxu0 0
    %686 = vmatpush1.bf16.msra.mxu0 0
    %687 = vmatprep.subr.bf16.mxu0 0
    %688 = vmatpush1.bf16.msra.mxu0 0
    %689 = vmatprep.subr.bf16.mxu0 0
    %690 = vmatpush1.bf16.msra.mxu0 0
    %691 = vmatprep.subr.bf16.mxu0 0
    %692 = vmatpush1.bf16.msra.mxu0 0
    %693 = vmatprep.subr.bf16.mxu0 0
    %694 = vmatpush1.bf16.msra.mxu0 0
    %695 = vmatprep.mubr.bf16.mxu0 0
    %696 = vmatmul.mubr.bf16.gmra.mrb[0].mxu0 %v658
    %v697 = vpop.f32.mrb[0].mxu0
    %v698 = vadd.f32 0.0, %v697
    %v699 = vpop.f32.mrb[0].mxu0
    %v700 = vpop.f32.mrb[0].mxu0
    %v701 = vadd.f32 0.0, %v700
    %v702 = vpop.f32.mrb[0].mxu0
    %703 = vmatprep.mubr.bf16.mxu0 0
    %704 = vmatmul.mubr.bf16.gmra.mrb[0].mxu0 %v661
    %v705 = vpop.f32.mrb[0].mxu0
    %v706 = vadd.f32 0.0, %v705
    %v707 = vpop.f32.mrb[0].mxu0
    %v708 = vpop.f32.mrb[0].mxu0
    %v709 = vadd.f32 0.0, %v708
    %v710 = vpop.f32.mrb[0].mxu0
    %711 = vdwg.mxu0
    %v712 = vadd.f32 %v467, %v698
    %v713 = vadd.f32 %v468, %v701
    %v714 = vadd.f32 %v469, %v706
    %v715 = vadd.f32 %v470, %v709
    %v716 = vadd.f32 %v712, %v133
    %v717 = vadd.f32 %v713, %v134
    %v718 = vadd.f32 %v714, %v135
    %v719 = vadd.f32 %v715, %v136
    %v720 = vld [vmem:[#allocation2 + $0x6] sm:$0x1]
    %v721 = vld [vmem:[#allocation2 + $0x7] sm:$0x1]
    %v722 = vsel %vm160, %v716, 0.0
    %723 = vadd.xlane.f32.xlu0 %v722
    %v724 = vpop.xlane.xlu0 %723
    %v725 = vsel %vm160, %v717, 0.0
    %726 = vadd.xlane.f32.xlu0 %v725
    %v727 = vpop.xlane.xlu0 %726
    %v728 = vsel %vm160, %v718, 0.0
    %729 = vadd.xlane.f32.xlu0 %v728
    %v730 = vpop.xlane.xlu0 %729
    %v731 = vsel %vm160, %v719, 0.0
    %732 = vadd.xlane.f32.xlu0 %v731
    %v733 = vpop.xlane.xlu0 %732
    %v734 = vrcp.pop 32.0
    %v735 = vmul.f32 %v724, %v734
    %v736 = vmul.f32 %v727, %v734
    %v737 = vmul.f32 %v730, %v734
    %v738 = vmul.f32 %v733, %v734
    %v739 = vsub.f32 %v716, %v735
    %v740 = vsub.f32 %v717, %v736
    %v741 = vsub.f32 %v718, %v737
    %v742 = vsub.f32 %v719, %v738
    %v743 = vmul.f32 %v739, %v739
    %v744 = vmul.f32 %v740, %v740
    %v745 = vmul.f32 %v741, %v741
    %v746 = vmul.f32 %v742, %v742
    %v747 = vsel %vm160, %v743, 0.0
    %748 = vadd.xlane.f32.xlu0 %v747
    %v749 = vpop.xlane.xlu0 %748
    %v750 = vsel %vm160, %v744, 0.0
    %751 = vadd.xlane.f32.xlu0 %v750
    %v752 = vpop.xlane.xlu0 %751
    %v753 = vsel %vm160, %v745, 0.0
    %754 = vadd.xlane.f32.xlu0 %v753
    %v755 = vpop.xlane.xlu0 %754
    %v756 = vsel %vm160, %v746, 0.0
    %757 = vadd.xlane.f32.xlu0 %v756
    %v758 = vpop.xlane.xlu0 %757
    %v759 = vmul.f32 %v749, %v734
    %v760 = vmul.f32 %v752, %v734
    %v761 = vmul.f32 %v755, %v734
    %v762 = vmul.f32 %v758, %v734
    %v763 = vadd.f32 %v759, 1e-12
    %v764 = vadd.f32 %v760, 1e-12
    %v765 = vadd.f32 %v761, 1e-12
    %v766 = vadd.f32 %v762, 1e-12
    %v767 = vrsqrt.pop %v763
    %v768 = vrsqrt.pop %v764
    %v769 = vrsqrt.pop %v765
    %v770 = vrsqrt.pop %v766
    %v771 = vmul.f32 %v739, %v767
    %v772 = vmul.f32 %v740, %v768
    %v773 = vmul.f32 %v741, %v769
    %v774 = vmul.f32 %v742, %v770
    %v775 = vlaneseq
    %v776 = vshrl.u32 %v775, 7
    %v777 = vsub.s32 0, %v776
    %v778 = vrot.slane %v720, %v777
    %v779 = vmul.f32 %v771, %v778
    %v780 = vmul.f32 %v772, %v778
    %v781 = vmul.f32 %v773, %v778
    %v782 = vmul.f32 %v774, %v778
    %v783 = vlaneseq
    %v784 = vshrl.u32 %v783, 7
    %v785 = vsub.s32 0, %v784
    %v786 = vrot.slane %v721, %v785
    %v787 = vadd.f32 %v779, %v786
    %v788 = vadd.f32 %v780, %v786
    %v789 = vadd.f32 %v781, %v786
    %v790 = vadd.f32 %v782, %v786
    %v791 = vpack.c.bf16 %v788, %v787
    %v792 = vpack.c.bf16 %v790, %v789
    %v793 = vld [vmem:[%s4] sm:$0xf]
    %v794 = vld [vmem:[%s4 + $0x4] sm:$0xf]
    %v795 = vld [vmem:[%s4 + $0x8] sm:$0xf]
    %v796 = vld [vmem:[%s4 + $0xc] sm:$0xf]
    %v797 = vld [vmem:[#allocation2 + $0x8] sm:$0x1]
    %v798 = vlaneseq
    %v799 = vshrl.u32 %v798, 7
    %v800 = vsub.s32 0, %v799
    %v801 = vrot.slane %v797, %v800
    %v806 = vunpack.c.l.b16 %v793
    %v807 = vunpack.c.l.b16 %v794
    %v808 = vunpack.c.l.b16 %v795
    %v809 = vunpack.c.l.b16 %v796
    %v810 = vpack.c.b16 %v807, %v806
    %v811 = vpack.c.b16 %v809, %v808
    %v815 = vsel %vm160, %v791, 0
    %v818 = vsel %vm160, %v792, 0
    %820 = vmatprep.subr.bf16.mxu0 0
    %821 = vmatpush1.bf16.msra.mxu0 %v810
    %822 = vmatprep.subr.bf16.mxu0 0
    %823 = vmatpush1.bf16.msra.mxu0 %v811
    %824 = vmatprep.subr.bf16.mxu0 0
    %825 = vmatpush1.bf16.msra.mxu0 0
    %826 = vmatprep.subr.bf16.mxu0 0
    %827 = vmatpush1.bf16.msra.mxu0 0
    %828 = vmatprep.subr.bf16.mxu0 0
    %829 = vmatpush1.bf16.msra.mxu0 0
    %830 = vmatprep.subr.bf16.mxu0 0
    %831 = vmatpush1.bf16.msra.mxu0 0
    %832 = vmatprep.subr.bf16.mxu0 0
    %833 = vmatpush1.bf16.msra.mxu0 0
    %834 = vmatprep.subr.bf16.mxu0 0
    %835 = vmatpush1.bf16.msra.mxu0 0
    %836 = vmatprep.subr.bf16.mxu0 0
    %837 = vmatpush1.bf16.msra.mxu0 0
    %838 = vmatprep.subr.bf16.mxu0 0
    %839 = vmatpush1.bf16.msra.mxu0 0
    %840 = vmatprep.subr.bf16.mxu0 0
    %841 = vmatpush1.bf16.msra.mxu0 0
    %842 = vmatprep.subr.bf16.mxu0 0
    %843 = vmatpush1.bf16.msra.mxu0 0
    %844 = vmatprep.subr.bf16.mxu0 0
    %845 = vmatpush1.bf16.msra.mxu0 0
    %846 = vmatprep.subr.bf16.mxu0 0
    %847 = vmatpush1.bf16.msra.mxu0 0
    %848 = vmatprep.subr.bf16.mxu0 0
    %849 = vmatpush1.bf16.msra.mxu0 0
    %850 = vmatprep.subr.bf16.mxu0 0
    %851 = vmatpush1.bf16.msra.mxu0 0
    %852 = vmatprep.mubr.bf16.mxu0 0
    %853 = vmatmul.mubr.bf16.gmra.mrb[0].mxu0 %v815
    %v854 = vpop.f32.mrb[0].mxu0
    %v855 = vadd.f32 %v801, %v854
    %v856 = vpop.f32.mrb[0].mxu0
    %v857 = vpop.f32.mrb[0].mxu0
    %v858 = vadd.f32 %v801, %v857
    %v859 = vpop.f32.mrb[0].mxu0
    %860 = vmatprep.mubr.bf16.mxu0 0
    %861 = vmatmul.mubr.bf16.gmra.mrb[0].mxu0 %v818
    %v862 = vpop.f32.mrb[0].mxu0
    %v863 = vadd.f32 %v801, %v862
    %v864 = vpop.f32.mrb[0].mxu0
    %v865 = vpop.f32.mrb[0].mxu0
    %v866 = vadd.f32 %v801, %v865
    %v867 = vpop.f32.mrb[0].mxu0
    %868 = vdwg.mxu0
    %v869 = vmul.f32 %v855, 0.5
    %v870 = vmul.f32 %v858, 0.5
    %v871 = vmul.f32 %v863, 0.5
    %v872 = vmul.f32 %v866, 0.5
    %v873 = vmul.f32 %v855, 0.70710677
    %v874 = vmul.f32 %v858, 0.70710677
    %v875 = vmul.f32 %v863, 0.70710677
    %v876 = vmul.f32 %v866, 0.70710677
    %v877 = verf.f32.pop %v873
    %v878 = verf.f32.pop %v874
    %v879 = verf.f32.pop %v875
    %v880 = verf.f32.pop %v876
    %v881 = vadd.f32 %v877, 1.0
    %v882 = vadd.f32 %v878, 1.0
    %v883 = vadd.f32 %v879, 1.0
    %v884 = vadd.f32 %v880, 1.0
    %v885 = vmul.f32 %v869, %v881
    %v886 = vmul.f32 %v870, %v882
    %v887 = vmul.f32 %v871, %v883
    %v888 = vmul.f32 %v872, %v884
    %v889 = vpack.c.bf16 %v886, %v885
    %v890 = vpack.c.bf16 %v888, %v887
    %v891 = vld [vmem:[%s5] sm:$0xf]
    %v892 = vld [vmem:[%s5 + $0x4] sm:$0xf]
    %v893 = vld [vmem:[%s5 + $0x8] sm:$0xf]
    %v894 = vld [vmem:[%s5 + $0xc] sm:$0xf]
    %v895 = vld [vmem:[%s5 + $0x10] sm:$0xf]
    %v896 = vld [vmem:[%s5 + $0x14] sm:$0xf]
    %v897 = vld [vmem:[%s5 + $0x18] sm:$0xf]
    %v898 = vld [vmem:[%s5 + $0x1c] sm:$0xf]
    %v899 = vld [vmem:[#allocation2 + $0x9] sm:$0x1]
    %v900 = vlaneseq
    %v901 = vshrl.u32 %v900, 7
    %v902 = vsub.s32 0, %v901
    %v903 = vrot.slane %v899, %v902
    %v912 = vunpack.c.l.b16 %v891
    %v913 = vunpack.c.l.b16 %v892
    %v914 = vunpack.c.l.b16 %v893
    %v915 = vunpack.c.l.b16 %v894
    %v916 = vunpack.c.l.b16 %v895
    %v917 = vunpack.c.l.b16 %v896
    %v918 = vunpack.c.l.b16 %v897
    %v919 = vunpack.c.l.b16 %v898
    %v920 = vpack.c.b16 %v913, %v912
    %v921 = vpack.c.b16 %v915, %v914
    %v922 = vpack.c.b16 %v917, %v916
    %v923 = vpack.c.b16 %v919, %v918
    %vm928 = vcmask 523264
    %v930 = vsel %vm928, %v889, 0
    %v933 = vsel %vm928, %v890, 0
    %935 = vmatprep.subr.bf16.mxu0 0
    %936 = vmatpush1.bf16.msra.mxu0 %v920
    %937 = vmatprep.subr.bf16.mxu0 0
    %938 = vmatpush1.bf16.msra.mxu0 %v921
    %939 = vmatprep.subr.bf16.mxu0 0
    %940 = vmatpush1.bf16.msra.mxu0 %v922
    %941 = vmatprep.subr.bf16.mxu0 0
    %942 = vmatpush1.bf16.msra.mxu0 %v923
    %943 = vmatprep.subr.bf16.mxu0 0
    %944 = vmatpush1.bf16.msra.mxu0 0
    %945 = vmatprep.subr.bf16.mxu0 0
    %946 = vmatpush1.bf16.msra.mxu0 0
    %947 = vmatprep.subr.bf16.mxu0 0
    %948 = vmatpush1.bf16.msra.mxu0 0
    %949 = vmatprep.subr.bf16.mxu0 0
    %950 = vmatpush1.bf16.msra.mxu0 0
    %951 = vmatprep.subr.bf16.mxu0 0
    %952 = vmatpush1.bf16.msra.mxu0 0
    %953 = vmatprep.subr.bf16.mxu0 0
    %954 = vmatpush1.bf16.msra.mxu0 0
    %955 = vmatprep.subr.bf16.mxu0 0
    %956 = vmatpush1.bf16.msra.mxu0 0
    %957 = vmatprep.subr.bf16.mxu0 0
    %958 = vmatpush1.bf16.msra.mxu0 0
    %959 = vmatprep.subr.bf16.mxu0 0
    %960 = vmatpush1.bf16.msra.mxu0 0
    %961 = vmatprep.subr.bf16.mxu0 0
    %962 = vmatpush1.bf16.msra.mxu0 0
    %963 = vmatprep.subr.bf16.mxu0 0
    %964 = vmatpush1.bf16.msra.mxu0 0
    %965 = vmatprep.subr.bf16.mxu0 0
    %966 = vmatpush1.bf16.msra.mxu0 0
    %967 = vmatprep.mubr.bf16.mxu0 0
    %968 = vmatmul.mubr.bf16.gmra.mrb[0].mxu0 %v930
    %v969 = vpop.f32.mrb[0].mxu0
    %v970 = vadd.f32 %v903, %v969
    %v971 = vpop.f32.mrb[0].mxu0
    %v972 = vpop.f32.mrb[0].mxu0
    %v973 = vadd.f32 %v903, %v972
    %v974 = vpop.f32.mrb[0].mxu0
    %975 = vmatprep.mubr.bf16.mxu0 0
    %976 = vmatmul.mubr.bf16.gmra.mrb[0].mxu0 %v933
    %v977 = vpop.f32.mrb[0].mxu0
    %v978 = vadd.f32 %v903, %v977
    %v979 = vpop.f32.mrb[0].mxu0
    %v980 = vpop.f32.mrb[0].mxu0
    %v981 = vadd.f32 %v903, %v980
    %v982 = vpop.f32.mrb[0].mxu0
    %983 = vdwg.mxu0
    %v984 = vadd.f32 %v970, %v787
    %v985 = vadd.f32 %v973, %v788
    %v986 = vadd.f32 %v978, %v789
    %v987 = vadd.f32 %v981, %v790
    %v988 = vld [vmem:[#allocation2 + $0xa] sm:$0x1]
    %v989 = vld [vmem:[#allocation2 + $0xb] sm:$0x1]
    %v990 = vsel %vm160, %v984, 0.0
    %991 = vadd.xlane.f32.xlu0 %v990
    %v992 = vpop.xlane.xlu0 %991
    %v993 = vsel %vm160, %v985, 0.0
    %994 = vadd.xlane.f32.xlu0 %v993
    %v995 = vpop.xlane.xlu0 %994
    %v996 = vsel %vm160, %v986, 0.0
    %997 = vadd.xlane.f32.xlu0 %v996
    %v998 = vpop.xlane.xlu0 %997
    %v999 = vsel %vm160, %v987, 0.0
    %1000 = vadd.xlane.f32.xlu0 %v999
    %v1001 = vpop.xlane.xlu0 %1000
    %v1002 = vmul.f32 %v992, %v734
    %v1003 = vmul.f32 %v995, %v734
    %v1004 = vmul.f32 %v998, %v734
    %v1005 = vmul.f32 %v1001, %v734
    %v1006 = vsub.f32 %v984, %v1002
    %v1007 = vsub.f32 %v985, %v1003
    %v1008 = vsub.f32 %v986, %v1004
    %v1009 = vsub.f32 %v987, %v1005
    %v1010 = vmul.f32 %v1006, %v1006
    %v1011 = vmul.f32 %v1007, %v1007
    %v1012 = vmul.f32 %v1008, %v1008
    %v1013 = vmul.f32 %v1009, %v1009
    %v1014 = vsel %vm160, %v1010, 0.0
    %1015 = vadd.xlane.f32.xlu0 %v1014
    %v1016 = vpop.xlane.xlu0 %1015
    %v1017 = vsel %vm160, %v1011, 0.0
    %1018 = vadd.xlane.f32.xlu0 %v1017
    %v1019 = vpop.xlane.xlu0 %1018
    %v1020 = vsel %vm160, %v1012, 0.0
    %1021 = vadd.xlane.f32.xlu0 %v1020
    %v1022 = vpop.xlane.xlu0 %1021
    %v1023 = vsel %vm160, %v1013, 0.0
    %1024 = vadd.xlane.f32.xlu0 %v1023
    %v1025 = vpop.xlane.xlu0 %1024
    %v1026 = vmul.f32 %v1016, %v734
    %v1027 = vmul.f32 %v1019, %v734
    %v1028 = vmul.f32 %v1022, %v734
    %v1029 = vmul.f32 %v1025, %v734
    %v1030 = vadd.f32 %v1026, 1e-12
    %v1031 = vadd.f32 %v1027, 1e-12
    %v1032 = vadd.f32 %v1028, 1e-12
    %v1033 = vadd.f32 %v1029, 1e-12
    %v1034 = vrsqrt.pop %v1030
    %v1035 = vrsqrt.pop %v1031
    %v1036 = vrsqrt.pop %v1032
    %v1037 = vrsqrt.pop %v1033
    %v1038 = vmul.f32 %v1006, %v1034
    %v1039 = vmul.f32 %v1007, %v1035
    %v1040 = vmul.f32 %v1008, %v1036
    %v1041 = vmul.f32 %v1009, %v1037
    %v1042 = vlaneseq
    %v1043 = vshrl.u32 %v1042, 7
    %v1044 = vsub.s32 0, %v1043
    %v1045 = vrot.slane %v988, %v1044
    %v1046 = vmul.f32 %v1038, %v1045
    %v1047 = vmul.f32 %v1039, %v1045
    %v1048 = vmul.f32 %v1040, %v1045
    %v1049 = vmul.f32 %v1041, %v1045
    %v1050 = vlaneseq
    %v1051 = vshrl.u32 %v1050, 7
    %v1052 = vsub.s32 0, %v1051
    %v1053 = vrot.slane %v989, %v1052
    %v1054 = vadd.f32 %v1046, %v1053
    %v1055 = vadd.f32 %v1047, %v1053
    %v1056 = vadd.f32 %v1048, %v1053
    %v1057 = vadd.f32 %v1049, %v1053
    %1058 = vst.msk [vmem:[#allocation5] sm:$0xff] %vm160, %v1054
    %1059 = vst.msk [vmem:[#allocation5 + $0x8] sm:$0xff] %vm160, %v1055
    %1060 = vst.msk [vmem:[#allocation5 + $0x10] sm:$0xff] %vm160, %v1056
    %1061 = vst.msk [vmem:[#allocation5 + $0x18] sm:$0xff] %vm160, %v1057
    // Predicated region
    $region34: #{bert_layer_cpe.1} parent=1 // pred_check
      _
    $region35: #{bert_layer_cpe.1} parent=1 // pred_check_branch
      %1063 = sbr.rel (0) target = $region37
    $region36: #{bert_layer_cpe.1} parent=1 // pred_region
      %s1065 = ssub.s32 512, 512
      %1066 = vsyncadd [#allocation4], %s1065
      %s1067 = sshll.u32 [#allocation5], 4
      %s1068 = int_to_ptr.vmem [resolvable:$true] %s1067
      %1073 = dma.vmem_to_hbm [thread:$0]  %s1068, 512, %s7, [#allocation4], 128, 128, 8
    $region37: #{bert_layer_cpe.1} parent=1 // pred_fallthru
      _
    // Predicated region
    $region38: #{bert_layer_cpe.1} parent=1 // pred_check
      _
    $region39: #{bert_layer_cpe.1} parent=1 // pred_check_branch
      %1075 = sbr.rel (0) target = $region41
    $region40: #{bert_layer_cpe.1} parent=1 // pred_region
      %1076 = dma.done [#allocation4], 512
    $region41: #{bert_layer_cpe.1} parent=1 // pred_fallthru
      _
    %1077 = vsyncpa [#allocation3], 1
    %1078 = vsyncpa [#allocation4], 1

</llo_original>
